<compile_context>
chip_gen: v7x
topology: tpu7x:2x2x1
jax: 0.10.0
libtpu: 0.0.40
codegen_flags: <defaults>
</compile_context>

<pallas_src>
import numpy as np
import jax
import jax.numpy as jnp
from jax.experimental import pallas as pl
from jax.experimental.pallas import tpu as pltpu

# ---- module hyper-parameters (small, consistent with the PyTorch module) ----
N = 2                      # batch
CIN = 4                    # input_channels
COUT = 8                   # output_channels
H = W = 16                 # input_height / input_width
KH = KW = 3                # conv_kernel_size
STRIDE = 1                 # conv_stride (module usage assumes spatial-preserving conv)
PAD = 1                    # conv_padding
POOL = 2                   # pool_size
HP, WP = H // POOL, W // POOL       # pooled output spatial dims (8, 8)
S = N * HP * WP                     # pooled spatial positions = 128 (lane dim)
PP = POOL * POOL                    # number of pool offsets = 4
PATCH = POOL + KH - 1               # 4: patch side covering all conv taps of one pool window
K = CIN * PATCH * PATCH             # 64 patch features (contraction depth)
KEXT = 72                           # K + 1 (bias row), zero-padded up to a multiple of 8


def cnn_kernel(w_ref, p_ref, o_ref):
    # w_ref: (PP*COUT, KEXT)  conv weight embedded at each pool offset + bias column
    # p_ref: (KEXT, S)        4x4 stride-2 patches (+ ones row for bias); lanes = (n, hp, wp)
    # o_ref: (COUT, S)        fused conv+bias+maxpool+relu output, one unmasked (8,128) tile
    # single MXU matmul: conv output (incl. bias) at every pool offset of every pooled position
    acc = jnp.dot(w_ref[...], p_ref[...], preferred_element_type=jnp.float32)   # (PP*COUT, S)
    # 2x2 max-pool == elementwise max over the 4 sublane-aligned pool-offset blocks
    m = jnp.maximum(jnp.maximum(acc[0 * COUT:1 * COUT], acc[1 * COUT:2 * COUT]),
                    jnp.maximum(acc[2 * COUT:3 * COUT], acc[3 * COUT:4 * COUT]))  # (COUT, S)
    # ReLU after the max is exact (ReLU is monotone; bias already added via the matmul)
    o_ref[...] = jnp.maximum(m, 0.0).astype(o_ref.dtype)


def cnn_forward(x_nchw, w_oihw, b):
    """Forward pass matching the PyTorch CNN module. x_nchw: (N, CIN, H, W) f32."""
    assert STRIDE == 1 and H % POOL == 0 and W % POOL == 0
    n, cin, h, w = x_nchw.shape
    cout = w_oihw.shape[0]
    assert (n, cin, h, w, cout) == (N, CIN, H, W, COUT)
    f32 = jnp.float32

    # ---- patches: ONE fused op.  4x4 windows, stride 2 (one window per pooled position),
    #      output layout (CIN*4*4, N, HP, WP); features ordered (cin, i, j), cin slowest. ----
    patches = jax.lax.conv_general_dilated_patches(
        x_nchw.astype(f32), filter_shape=(PATCH, PATCH),
        window_strides=(POOL, POOL), padding=((PAD, PAD), (PAD, PAD)),
        dimension_numbers=("NCHW", "OIHW", "CNHW"),
        precision=jax.lax.Precision.HIGHEST)          # identity taps -> exact copies of x
    patches = patches.reshape(K, S)                   # lanes = (n, hp, wp); plain collapse
    patches_ext = jnp.concatenate(
        [patches, jnp.ones((1, S), f32), jnp.zeros((KEXT - K - 1, S), f32)], axis=0)  # (72,128)

    # ---- weight: embed the 3x3 kernel at each of the 4 pool offsets inside the 4x4 patch;
    #      rows ordered (pool_offset, cout), columns ordered (cin, i, j) to match patches. ----
    blocks = []
    for ph in range(POOL):
        for pw in range(POOL):
            w_emb = jnp.pad(w_oihw.astype(f32),
                            ((0, 0), (0, 0), (ph, PATCH - KH - ph), (pw, PATCH - KW - pw)))
            blocks.append(w_emb.reshape(COUT, K))
    w_big = jnp.concatenate(blocks, axis=0)                          # (PP*COUT, K)
    bias_col = jnp.tile(b.astype(f32), PP)[:, None]                  # (PP*COUT, 1), b[cout] per row
    w_ext = jnp.concatenate(
        [w_big, bias_col, jnp.zeros((PP * COUT, KEXT - K - 1), f32)], axis=1)   # (32, 72)

    out = pl.pallas_call(
        cnn_kernel,
        out_shape=jax.ShapeDtypeStruct((COUT, S), jnp.float32),
        in_specs=[pl.BlockSpec(memory_space=pltpu.MemorySpace.VMEM),
                  pl.BlockSpec(memory_space=pltpu.MemorySpace.VMEM)],
        out_specs=pl.BlockSpec(memory_space=pltpu.MemorySpace.VMEM),
    )(w_ext, patches_ext)

    # glue: (COUT, N*HP*WP) -> PyTorch flatten order (N, COUT*HP*WP); tiny 4 KiB transpose.
    # TODO(synk): fold this final transpose into the downstream consumer if one exists.
    out = out.reshape(COUT, N, HP * WP)
    return jnp.transpose(out, (1, 0, 2)).reshape(N, COUT * HP * WP)


def reference_forward(x_nchw, w_oihw, b):
    """Pure-JAX reference of the PyTorch forward (NCHW)."""
    y = jax.lax.conv_general_dilated(
        x_nchw, w_oihw, window_strides=(STRIDE, STRIDE),
        padding=((PAD, PAD), (PAD, PAD)),
        dimension_numbers=("NCHW", "OIHW", "NCHW"),
        precision=jax.lax.Precision.HIGHEST)
    y = jnp.maximum(y + b[None, :, None, None], 0.0)
    y = y.reshape(N, COUT, HP, POOL, WP, POOL).max(axis=(3, 5))
    return y.reshape(N, COUT * HP * WP)


if __name__ == "__main__":
    key = jax.random.PRNGKey(0)
    kx, kw, kb = jax.random.split(key, 3)

    # deterministic synthetic parameters (shapes from nn.Conv2d(CIN, COUT, 3, 1, 1))
    x = jax.random.normal(kx, (N, CIN, H, W), dtype=jnp.float32)
    w = jax.random.normal(kw, (COUT, CIN, KH, KW), dtype=jnp.float32) * 0.1
    b = jax.random.normal(kb, (COUT,), dtype=jnp.float32) * 0.1

    fwd = jax.jit(cnn_forward)          # fuses the (now minimal) wrapper glue around the kernel
    out = jax.block_until_ready(fwd(x, w, b))

    ref = jax.block_until_ready(reference_forward(x, w, b))
    assert out.shape == (N, COUT * HP * WP), out.shape
    assert np.allclose(np.asarray(out), np.asarray(ref), rtol=1e-4, atol=1e-4)

    print("KERNEL_OK")
</pallas_src>

<mosaic_0001>
module attributes {stable_mosaic.version = 11 : i64} {
  func.func @cnn_kernel(%arg0: memref<32x72xf32, #tpu.memory_space<vmem>>, %arg1: memref<72x128xf32, #tpu.memory_space<vmem>>, %arg2: memref<8x128xf32, #tpu.memory_space<vmem>>) attributes {dimension_semantics = [], scalar_prefetch = 0 : i64, scratch_operands = 0 : i64, tpu.core_type = #tpu.core_type<tc>} {
    %c0 = arith.constant 0 : index
    %c0_0 = arith.constant 0 : index
    %0 = vector.load %arg0[%c0, %c0_0] : memref<32x72xf32, #tpu.memory_space<vmem>>, vector<32x72xf32>
    %c0_1 = arith.constant 0 : index
    %c0_2 = arith.constant 0 : index
    %1 = vector.load %arg1[%c0_1, %c0_2] : memref<72x128xf32, #tpu.memory_space<vmem>>, vector<72x128xf32>
    %cst = arith.constant dense<0.000000e+00> : vector<32x128xf32>
    %2 = tpu.matmul %0, %1, %cst {dimension_numbers = #tpu.dot_dimension_numbers<[1], [0], [0], [1], [0, 0, 1, 1], [], []>} : vector<32x72xf32>, vector<72x128xf32>, vector<32x128xf32> -> vector<32x128xf32>
    %3 = vector.extract_strided_slice %2 {offsets = [0, 0], sizes = [8, 128], strides = [1, 1]} : vector<32x128xf32> to vector<8x128xf32>
    %4 = vector.extract_strided_slice %2 {offsets = [8, 0], sizes = [8, 128], strides = [1, 1]} : vector<32x128xf32> to vector<8x128xf32>
    %5 = arith.maximumf %3, %4 : vector<8x128xf32>
    %6 = vector.extract_strided_slice %2 {offsets = [16, 0], sizes = [8, 128], strides = [1, 1]} : vector<32x128xf32> to vector<8x128xf32>
    %7 = vector.extract_strided_slice %2 {offsets = [24, 0], sizes = [8, 128], strides = [1, 1]} : vector<32x128xf32> to vector<8x128xf32>
    %8 = arith.maximumf %6, %7 : vector<8x128xf32>
    %9 = arith.maximumf %5, %8 : vector<8x128xf32>
    %cst_3 = arith.constant 0.000000e+00 : f32
    %10 = vector.broadcast %cst_3 : f32 to vector<8x128xf32>
    %11 = arith.maximumf %9, %10 : vector<8x128xf32>
    %c0_4 = arith.constant 0 : index
    %c0_5 = arith.constant 0 : index
    %12 = vector.load %arg2[%c0_4, %c0_5] : memref<8x128xf32, #tpu.memory_space<vmem>>, vector<8x128xf32>
    tpu.vector_store %arg2[%c0_4, %c0_5], %11 {strides = array<i32>} : memref<8x128xf32, #tpu.memory_space<vmem>>, vector<8x128xf32>,
    return
  }
}

</mosaic_0001>

<llo_original>
// kernel: tile.8
$region0: #{tile.8}
  #allocation0 [shape = 's32[1]{0}', space=sflag, size = 0x4, scoped, tag = 'scoped memory for tile.8']
  %s0 = inlined_call_operand.vmem [shape: f32[8], index: 0, kind: input, shape index: {}]
  %s1 = inlined_call_operand.vmem [shape: f32[4,8], index: 1, kind: output, shape index: {}]
  // Predicated region
  $region2: #{tile.8} parent=0 // pred_check
    _
  $region3: #{tile.8} parent=0 // pred_check_branch
    %3 = sbr.rel (0) target = $region5
  $region4: #{tile.8} parent=0 // pred_region
    _
  $region5: #{tile.8} parent=0 // pred_fallthru
    _
  %v4 = vld [vmem:[%s0] ss:$0 sm:$0xff]
  %5 = vst [vmem:[%s1] sm:$0xf] %v4

// kernel: tile.0
$region0: #{tile.0}
  %s0 = inlined_call_operand.vmem [shape: f32[4,8], index: 0, kind: input, shape index: {}]
  %s1 = inlined_call_operand.vmem [shape: f32[32,1], index: 1, kind: output, shape index: {}]
  $region1: #{tile.0} parent=0
    #allocation0 [shape = 'u8[4096]{0}', space=vmem, size = 0x1000, scoped, tag = 'scoped mem for input reshape']
    %s3 = sshllo.u32 0, 4
    %v4 = vld [vmem:[%s0] sm:%s3]
    %5 = vst [vmem:[#allocation0] sm:%s3] %v4
    %v6 = vld [vmem:[#allocation0] sm:$0xf]
    %vm7 = vcmask 7168
    %8 = vst.msk [vmem:[%s1] ss:$8 sm:$0xf] %vm7, %v6
    %v9 = vld [vmem:[#allocation0] sm:$0xf]
    %10 = vrot.lane.b32.xlu0 %v9, 127
    %v11 = vpop.permute.xlu0 %10
    %vm12 = vcmask 7168
    %s13 = scalar_lea.vmem %s1, 1
    %14 = vst.msk [vmem:[%s13] ss:$8 sm:$0xf] %vm12, %v11
    %v15 = vld [vmem:[#allocation0] sm:$0xf]
    %16 = vrot.lane.b32.xlu0 %v15, 126
    %v17 = vpop.permute.xlu0 %16
    %vm18 = vcmask 7168
    %s19 = scalar_lea.vmem %s1, 2
    %20 = vst.msk [vmem:[%s19] ss:$8 sm:$0xf] %vm18, %v17
    %v21 = vld [vmem:[#allocation0] sm:$0xf]
    %22 = vrot.lane.b32.xlu0 %v21, 125
    %v23 = vpop.permute.xlu0 %22
    %vm24 = vcmask 7168
    %s25 = scalar_lea.vmem %s1, 3
    %26 = vst.msk [vmem:[%s25] ss:$8 sm:$0xf] %vm24, %v23
    %v27 = vld [vmem:[#allocation0] sm:$0xf]
    %28 = vrot.lane.b32.xlu0 %v27, 124
    %v29 = vpop.permute.xlu0 %28
    %vm30 = vcmask 7168
    %s31 = scalar_lea.vmem %s1, 4
    %32 = vst.msk [vmem:[%s31] ss:$8 sm:$0xf] %vm30, %v29
    %v33 = vld [vmem:[#allocation0] sm:$0xf]
    %34 = vrot.lane.b32.xlu0 %v33, 123
    %v35 = vpop.permute.xlu0 %34
    %vm36 = vcmask 7168
    %s37 = scalar_lea.vmem %s1, 5
    %38 = vst.msk [vmem:[%s37] ss:$8 sm:$0xf] %vm36, %v35
    %v39 = vld [vmem:[#allocation0] sm:$0xf]
    %40 = vrot.lane.b32.xlu0 %v39, 122
    %v41 = vpop.permute.xlu0 %40
    %vm42 = vcmask 7168
    %s43 = scalar_lea.vmem %s1, 6
    %44 = vst.msk [vmem:[%s43] ss:$8 sm:$0xf] %vm42, %v41
    %v45 = vld [vmem:[#allocation0] sm:$0xf]
    %46 = vrot.lane.b32.xlu0 %v45, 121
    %v47 = vpop.permute.xlu0 %46
    %vm48 = vcmask 7168
    %s49 = scalar_lea.vmem %s1, 7
    %50 = vst.msk [vmem:[%s49] ss:$8 sm:$0xf] %vm48, %v47

// kernel: cnn_forward.1
$region0: #{cnn_forward.1}
  #allocation0 [shape = 'u32[]', space=smem, size = 0x4, offset = 0x4, fixed_abs, tag = 'smem constant byte address 0x4 - core index']
  #allocation1 [shape = 'u32[144,128]{1,0:T(1,128)}', space=vmem, size = 0x12000, scoped, tag = 'internal scratch']
  %s0 = inlined_call_operand.vmem [shape: f32[32,72], index: 0, kind: input, shape index: {}]
  %s1 = inlined_call_operand.vmem [shape: f32[72,128], index: 1, kind: input, shape index: {}]
  %s2 = inlined_call_operand.vmem [shape: f32[8,128], index: 2, kind: output, shape index: {}]
  %s3 = sld [smem:[#allocation0]]
  $region18: #{cnn_forward.1} parent=0
    _
  %s5 = ssub.s32 1, %s3
  %s6 = scalar_select 0, %s5, %s3
  // Predicated region
  $region2: #{cnn_forward.1} parent=0 // pred_check
    _
  $region3: #{cnn_forward.1} parent=0 // pred_check_branch
    %8 = sbr.rel (0) target = $region5
  $region4: #{cnn_forward.1} parent=0 // pred_region
    _
  $region5: #{cnn_forward.1} parent=0 // pred_fallthru
    _
  // Predicated region
  $region6: #{cnn_forward.1} parent=0 // pred_check
    _
  $region7: #{cnn_forward.1} parent=0 // pred_check_branch
    %10 = sbr.rel (0) target = $region9
  $region8: #{cnn_forward.1} parent=0 // pred_region
    _
  $region9: #{cnn_forward.1} parent=0 // pred_fallthru
    _
  %v11 = vld [vmem:[%s0] sm:$0xff]
  %v12 = vld [vmem:[%s0 + $0x8] sm:$0xff]
  %v13 = vld [vmem:[%s0 + $0x10] sm:$0xff]
  %v14 = vld [vmem:[%s0 + $0x18] sm:$0xff]
  %v15 = vld [vmem:[%s1] sm:$0xff]
  %v16 = vld [vmem:[%s1 + $0x8] sm:$0xff]
  %v17 = vld [vmem:[%s1 + $0x10] sm:$0xff]
  %v18 = vld [vmem:[%s1 + $0x18] sm:$0xff]
  %v19 = vld [vmem:[%s1 + $0x20] sm:$0xff]
  %v20 = vld [vmem:[%s1 + $0x28] sm:$0xff]
  %v21 = vld [vmem:[%s1 + $0x30] sm:$0xff]
  %v22 = vld [vmem:[%s1 + $0x38] sm:$0xff]
  %v23 = vld [vmem:[%s1 + $0x40] sm:$0xff]
  %vm24 = vcmask 588800
  %v26 = vsel %vm24, %v11, 0
  %v29 = vsel %vm24, %v12, 0
  %v32 = vsel %vm24, %v13, 0
  %v35 = vsel %vm24, %v14, 0
  %37 = vmatprep.subr.mxu0 0.0
  %38 = vmatpush1.msra.mxu0 %v15
  %39 = vmatprep.subr.mxu0 0.0
  %40 = vmatpush1.msra.mxu0 %v16
  %41 = vmatprep.subr.mxu0 0.0
  %42 = vmatpush1.msra.mxu0 %v17
  %43 = vmatprep.subr.mxu0 0.0
  %44 = vmatpush1.msra.mxu0 %v18
  %45 = vmatprep.subr.mxu0 0.0
  %46 = vmatpush1.msra.mxu0 %v19
  %47 = vmatprep.subr.mxu0 0.0
  %48 = vmatpush1.msra.mxu0 %v20
  %49 = vmatprep.subr.mxu0 0.0
  %50 = vmatpush1.msra.mxu0 %v21
  %51 = vmatprep.subr.mxu0 0.0
  %52 = vmatpush1.msra.mxu0 %v22
  %53 = vmatprep.subr.mxu0 0.0
  %54 = vmatpush1.msra.mxu0 %v23
  %55 = vmatprep.subr.mxu0 0.0
  %56 = vmatpush1.msra.mxu0 0.0
  %57 = vmatprep.subr.mxu0 0.0
  %58 = vmatpush1.msra.mxu0 0.0
  %59 = vmatprep.subr.mxu0 0.0
  %60 = vmatpush1.msra.mxu0 0.0
  %61 = vmatprep.subr.mxu0 0.0
  %62 = vmatpush1.msra.mxu0 0.0
  %63 = vmatprep.subr.mxu0 0.0
  %64 = vmatpush1.msra.mxu0 0.0
  %65 = vmatprep.subr.mxu0 0.0
  %66 = vmatpush1.msra.mxu0 0.0
  %67 = vmatprep.subr.mxu0 0.0
  %68 = vmatpush1.msra.mxu0 0.0
  %69 = vmatprep.subr.mxu0 0.0
  %70 = vmatpush1.msra.mxu0 0.0
  %71 = vmatprep.subr.mxu0 0.0
  %72 = vmatpush1.msra.mxu0 0.0
  %73 = vmatprep.subr.mxu0 0.0
  %74 = vmatpush1.msra.mxu0 0.0
  %75 = vmatprep.subr.mxu0 0.0
  %76 = vmatpush1.msra.mxu0 0.0
  %77 = vmatprep.subr.mxu0 0.0
  %78 = vmatpush1.msra.mxu0 0.0
  %79 = vmatprep.subr.mxu0 0.0
  %80 = vmatpush1.msra.mxu0 0.0
  %81 = vmatprep.subr.mxu0 0.0
  %82 = vmatpush1.msra.mxu0 0.0
  %83 = vmatprep.subr.mxu0 0.0
  %84 = vmatpush1.msra.mxu0 0.0
  %85 = vmatprep.subr.mxu0 0.0
  %86 = vmatpush1.msra.mxu0 0.0
  %87 = vmatprep.subr.mxu0 0.0
  %88 = vmatpush1.msra.mxu0 0.0
  %89 = vmatprep.subr.mxu0 0.0
  %90 = vmatpush1.msra.mxu0 0.0
  %91 = vmatprep.subr.mxu0 0.0
  %92 = vmatpush1.msra.mxu0 0.0
  %93 = vmatprep.subr.mxu0 0.0
  %94 = vmatpush1.msra.mxu0 0.0
  %95 = vmatprep.subr.mxu0 0.0
  %96 = vmatpush1.msra.mxu0 0.0
  %97 = vmatprep.subr.mxu0 0.0
  %98 = vmatpush1.msra.mxu0 0.0
  %99 = vmatprep.subr.mxu0 0.0
  %100 = vmatpush1.msra.mxu0 0.0
  %101 = vmatprep.mubr.f32.mxu0 0.0
  %102 = vmatmul.mubr.f32.gmra.mrb[0].mxu0 %v26
  %v103 = vpop.f32.mrb[0].mxu0
  %v104 = vadd.f32 0.0, %v103
  %v105 = vpop.f32.mrb[0].mxu0
  %106 = vmatprep.mubr.f32.mxu0 0.0
  %107 = vmatmul.mubr.f32.gmra.mrb[0].mxu0 %v29
  %v108 = vpop.f32.mrb[0].mxu0
  %v109 = vadd.f32 0.0, %v108
  %v110 = vpop.f32.mrb[0].mxu0
  %111 = vmatprep.mubr.f32.mxu0 0.0
  %112 = vmatmul.mubr.f32.gmra.mrb[0].mxu0 %v32
  %v113 = vpop.f32.mrb[0].mxu0
  %v114 = vadd.f32 0.0, %v113
  %v115 = vpop.f32.mrb[0].mxu0
  %116 = vmatprep.mubr.f32.mxu0 0.0
  %117 = vmatmul.mubr.f32.gmra.mrb[0].mxu0 %v35
  %v118 = vpop.f32.mrb[0].mxu0
  %v119 = vadd.f32 0.0, %v118
  %v120 = vpop.f32.mrb[0].mxu0
  %121 = vdwg.mxu0
  %v122 = vmax.f32 %v104, %v109
  %v123 = vmax.f32 %v114, %v119
  %v124 = vmax.f32 %v122, %v123
  %v125 = vmax.f32 %v124, 0.0
  %126 = vst [vmem:[%s2] sm:$0xff] %v125
  // Predicated region
  $region10: #{cnn_forward.1} parent=0 // pred_check
    _
  $region11: #{cnn_forward.1} parent=0 // pred_check_branch
    %128 = sbr.rel (0) target = $region13
  $region12: #{cnn_forward.1} parent=0 // pred_region
    _
  $region13: #{cnn_forward.1} parent=0 // pred_fallthru
    _
  // Predicated region
  $region14: #{cnn_forward.1} parent=0 // pred_check
    _
  $region15: #{cnn_forward.1} parent=0 // pred_check_branch
    %130 = sbr.rel (0) target = $region17
  $region16: #{cnn_forward.1} parent=0 // pred_region
    _
  $region17: #{cnn_forward.1} parent=0 // pred_fallthru
    _

</llo_original>
